<compile_context>
chip_gen: v7x
topology: tpu7x:2x2x1
jax: 0.10.0
libtpu: 0.0.40
codegen_flags: <defaults>
</compile_context>

<pallas_src>
import jax
import jax.numpy as jnp
from jax.experimental import pallas as pl
from jax.experimental.pallas import tpu as pltpu


# ---------------------------------------------------------------------------
# Kernel
# ---------------------------------------------------------------------------
def mahjong_kernel(x_ref, w1_ref, w2_ref, w3_ref, w4_ref, w5_ref, bias_ref,
                   out_ref):
    b = bias_ref[...]              # (5, HIDDEN) f32 (row 4 holds padded fc5 bias)

    def layer(h, w_ref, bias_row, out_dtype):
        # h is bf16, w is bf16 -> native MXU path, f32 accumulation.
        acc = jnp.dot(h, w_ref[...], preferred_element_type=jnp.float32)
        return jnp.maximum(acc + bias_row, 0.0).astype(out_dtype)

    h = layer(x_ref[...], w1_ref, b[0], jnp.bfloat16)
    h = layer(h,          w2_ref, b[1], jnp.bfloat16)
    h = layer(h,          w3_ref, b[2], jnp.bfloat16)
    h = layer(h,          w4_ref, b[3], jnp.bfloat16)
    out_ref[...] = layer(h, w5_ref, b[4, :out_ref.shape[-1]], out_ref.dtype)


# ---------------------------------------------------------------------------
# Parameter folding (BN -> Linear), padding, bf16 cast, bias packing
# ---------------------------------------------------------------------------
def fold_params(p, weight_dtype=jnp.bfloat16):
    """Return ([w1..w5] (bf16), bias_slab (5, hidden) f32, real_out_dim)."""
    s1, t1 = p["bn1_scale"], p["bn1_shift"]
    s2, t2 = p["bn2_scale"], p["bn2_shift"]

    def fold(w, b, s, t):
        # (x*s + t) @ w + b == x @ (s^T * w) + (t @ w + b)   (exact, f32)
        return s.reshape(-1, 1) * w, t @ w + b

    w1, b1 = fold(p["w1"], p["b1"], s1, t1)
    w2, b2 = fold(p["w2"], p["b2"], s2, t2)
    w3, b3 = fold(p["w3"], p["b3"], s2, t2)
    w4, b4 = fold(p["w4"], p["b4"], s2, t2)
    w5, b5 = fold(p["w5"], p["b5"], s2, t2)

    hidden = w1.shape[1]
    out_dim = w5.shape[1]
    out_pad = max(128, ((out_dim + 127) // 128) * 128)   # lane-dense output
    if out_pad > out_dim:
        w5 = jnp.pad(w5, ((0, 0), (0, out_pad - out_dim)))
        b5 = jnp.pad(b5, ((0, 0), (0, out_pad - out_dim)))

    def to_row(b):   # pad each bias row to `hidden` lanes so we can stack them
        return jnp.pad(b, ((0, 0), (0, hidden - b.shape[1])))

    bias = jnp.concatenate([to_row(b1), to_row(b2), to_row(b3),
                            to_row(b4), to_row(b5)], axis=0).astype(jnp.float32)
    weights = [w.astype(weight_dtype) for w in (w1, w2, w3, w4, w5)]
    return weights, bias, out_dim


def _round_up(n, m):
    return ((n + m - 1) // m) * m


# ---------------------------------------------------------------------------
# Wrapper
# ---------------------------------------------------------------------------
def mahjong_net_forward(x, params, weight_dtype=jnp.bfloat16, tile=512):
    """x: (B, input) float32. Returns (B, out) float32."""
    B, in_dim = x.shape
    weights, bias, out_dim = fold_params(params, weight_dtype)
    hidden = weights[0].shape[1]
    out_pad = weights[4].shape[1]

    # Batch tiling: large batches use `tile`-row tiles (parallel grid axis,
    # sweep 256/512/1024); small batches use one sublane-aligned tile.
    # Batch is zero-padded to a tile multiple -> always a pipelined cdiv grid,
    # never a single giant (B, in) block.
    tm = tile if B >= tile else _round_up(B, 8)
    B_pad = _round_up(B, tm)
    grid = (B_pad // tm,)

    # bf16 input: the kernel feeds the MXU in bf16 anyway, so numerics are
    # unchanged but input DMA bytes are halved.
    xb = x.astype(jnp.bfloat16)
    if B_pad > B:
        xb = jnp.pad(xb, ((0, B_pad - B), (0, 0)))

    def const_spec(shape):
        return pl.BlockSpec(shape, lambda i: (0, 0))

    in_specs = [pl.BlockSpec((tm, in_dim), lambda i: (i, 0))]
    in_specs += [const_spec(w.shape) for w in weights]
    in_specs += [const_spec(bias.shape)]
    out_specs = pl.BlockSpec((tm, out_pad), lambda i: (i, 0))

    flops = 2 * B_pad * (in_dim * hidden + 3 * hidden * hidden
                         + hidden * out_pad)
    bytes_accessed = (xb.size * 2                      # bf16 input
                      + B_pad * out_pad * 4            # f32 output
                      + sum(w.size * 2 for w in weights)
                      + bias.size * 4)

    out = pl.pallas_call(
        mahjong_kernel,
        out_shape=jax.ShapeDtypeStruct((B_pad, out_pad), jnp.float32),
        grid=grid,
        in_specs=in_specs,
        out_specs=out_specs,
        compiler_params=pltpu.CompilerParams(
            dimension_semantics=("parallel",)),
        cost_estimate=pl.CostEstimate(flops=flops, transcendentals=0,
                                      bytes_accessed=bytes_accessed),
    )(xb, *weights, bias)

    # Consumers that can use the 128-lane padded slab directly can skip this
    # slice (it is an extra HBM pass for very large B).
    return out[:B, :out_dim]


# ---------------------------------------------------------------------------
# Synthetic parameters (shapes match MahjongNet.__init__)
# ---------------------------------------------------------------------------
def make_params(key, in_dim, hidden, out_dim, eps=1e-5):
    """PyTorch Linear weight is (out, in); we store the transpose (in, out).
    BatchNorm1d is represented by eval-mode scale/shift vectors."""
    keys = jax.random.split(key, 18)
    k = iter(keys)

    def lin(kw, kb, fan_in, fan_out):
        w = jax.random.normal(kw, (fan_in, fan_out), jnp.float32) * 0.05
        b = jax.random.normal(kb, (1, fan_out), jnp.float32) * 0.05
        return w, b

    w1, b1 = lin(next(k), next(k), in_dim, hidden)
    w2, b2 = lin(next(k), next(k), hidden, hidden)
    w3, b3 = lin(next(k), next(k), hidden, hidden)
    w4, b4 = lin(next(k), next(k), hidden, hidden)
    w5, b5 = lin(next(k), next(k), hidden, out_dim)

    def bn(kg, kb, km, kv, dim):
        gamma = 1.0 + 0.1 * jax.random.normal(kg, (1, dim), jnp.float32)
        beta = 0.1 * jax.random.normal(kb, (1, dim), jnp.float32)
        run_mean = 0.1 * jax.random.normal(km, (1, dim), jnp.float32)
        run_var = 1.0 + 0.1 * jax.random.uniform(kv, (1, dim), jnp.float32)
        scale = gamma / jnp.sqrt(run_var + eps)
        shift = beta - run_mean * scale
        return scale, shift

    bn1_scale, bn1_shift = bn(next(k), next(k), next(k), next(k), in_dim)
    bn2_scale, bn2_shift = bn(next(k), next(k), next(k), next(k), hidden)

    return dict(
        w1=w1, b1=b1, w2=w2, b2=b2, w3=w3, b3=b3, w4=w4, b4=b4, w5=w5, b5=b5,
        bn1_scale=bn1_scale, bn1_shift=bn1_shift,
        bn2_scale=bn2_scale, bn2_shift=bn2_shift,
    )


# ---------------------------------------------------------------------------
# References
# ---------------------------------------------------------------------------
def reference_forward(x, p):
    """Pure-JAX f32 eval-mode reference matching the PyTorch forward
    (dropout is identity in eval mode)."""
    relu = lambda v: jnp.maximum(v, 0.0)
    h = x * p["bn1_scale"] + p["bn1_shift"]
    h = relu(h @ p["w1"] + p["b1"])
    h = relu((h * p["bn2_scale"] + p["bn2_shift"]) @ p["w2"] + p["b2"])
    h = relu((h * p["bn2_scale"] + p["bn2_shift"]) @ p["w3"] + p["b3"])
    h = relu((h * p["bn2_scale"] + p["bn2_shift"]) @ p["w4"] + p["b4"])
    h = relu((h * p["bn2_scale"] + p["bn2_shift"]) @ p["w5"] + p["b5"])
    return h


def reference_fused(x, weights, bias, out_dim):
    """Pure-JAX replay of the exact kernel math (folded BN, bf16 activations,
    bf16 weights, f32 accumulation)."""
    h = x.astype(jnp.bfloat16)
    for i, w in enumerate(weights):
        n = w.shape[1]
        acc = jnp.dot(h, w, preferred_element_type=jnp.float32)
        h = jnp.maximum(acc + bias[i, :n], 0.0)
        if i < len(weights) - 1:
            h = h.astype(jnp.bfloat16)
    return h[:, :out_dim]


# ---------------------------------------------------------------------------
if __name__ == "__main__":
    IN_DIM, HIDDEN, OUT_DIM = 128, 256, 64

    key = jax.random.PRNGKey(0)
    kx, kp, kx2 = jax.random.split(key, 3)
    params = make_params(kp, IN_DIM, HIDDEN, OUT_DIM)
    weights, bias, od = fold_params(params)

    # --- small batch (single aligned tile) ---
    B = 8
    x = jax.random.normal(kx, (B, IN_DIM), jnp.float32)
    out = jax.block_until_ready(mahjong_net_forward(x, params))
    assert out.shape == (B, OUT_DIM)
    ref_tight = reference_fused(x, weights, bias, od)
    assert jnp.allclose(out, ref_tight, atol=2e-3, rtol=2e-3), \
        "small-batch kernel mismatch vs bf16-matched reference"
    ref_f32 = reference_forward(x, params)
    assert jnp.allclose(out, ref_f32, atol=1e-1, rtol=1e-1), \
        "small-batch kernel mismatch vs f32 reference"

    # --- non-multiple batch exercising pad + cdiv grid (2 parallel steps) ---
    B2 = 520
    x2 = jax.random.normal(kx2, (B2, IN_DIM), jnp.float32)
    out2 = jax.block_until_ready(mahjong_net_forward(x2, params, tile=512))
    assert out2.shape == (B2, OUT_DIM)
    ref2 = reference_fused(x2, weights, bias, od)
    assert jnp.allclose(out2, ref2, atol=2e-3, rtol=2e-3), \
        "padded-batch kernel mismatch vs bf16-matched reference"

    print("KERNEL_OK")
</pallas_src>

<mosaic_0001>
module attributes {stable_mosaic.version = 11 : i64} {
  func.func @mahjong_kernel(%arg0: i32, %arg1: memref<8x128xbf16, #tpu.memory_space<vmem>>, %arg2: memref<128x256xbf16, #tpu.memory_space<vmem>>, %arg3: memref<256x256xbf16, #tpu.memory_space<vmem>>, %arg4: memref<256x256xbf16, #tpu.memory_space<vmem>>, %arg5: memref<256x256xbf16, #tpu.memory_space<vmem>>, %arg6: memref<256x128xbf16, #tpu.memory_space<vmem>>, %arg7: memref<5x256xf32, #tpu.memory_space<vmem>>, %arg8: memref<8x128xf32, #tpu.memory_space<vmem>>) attributes {dimension_semantics = [#tpu.dimension_semantics<parallel>], iteration_bounds = array<i64: 1>, scalar_prefetch = 0 : i64, scratch_operands = 0 : i64, tpu.core_type = #tpu.core_type<tc>, window_params = [{transform_indices = @transform_0, window_bounds = array<i64: 8, 128>}, {pipeline_mode = #tpu.pipeline_mode<synchronous>, transform_indices = @transform_1, window_bounds = array<i64: 128, 256>}, {pipeline_mode = #tpu.pipeline_mode<synchronous>, transform_indices = @transform_2, window_bounds = array<i64: 256, 256>}, {pipeline_mode = #tpu.pipeline_mode<synchronous>, transform_indices = @transform_3, window_bounds = array<i64: 256, 256>}, {pipeline_mode = #tpu.pipeline_mode<synchronous>, transform_indices = @transform_4, window_bounds = array<i64: 256, 256>}, {pipeline_mode = #tpu.pipeline_mode<synchronous>, transform_indices = @transform_5, window_bounds = array<i64: 256, 128>}, {pipeline_mode = #tpu.pipeline_mode<synchronous>, transform_indices = @transform_6, window_bounds = array<i64: 5, 256>}, {transform_indices = @transform_7, window_bounds = array<i64: 8, 128>}]} {
    %c0 = arith.constant 0 : index
    %c0_0 = arith.constant 0 : index
    %0 = vector.load %arg7[%c0, %c0_0] : memref<5x256xf32, #tpu.memory_space<vmem>>, vector<5x256xf32>
    %c0_1 = arith.constant 0 : index
    %c0_2 = arith.constant 0 : index
    %1 = vector.load %arg1[%c0_1, %c0_2] : memref<8x128xbf16, #tpu.memory_space<vmem>>, vector<8x128xbf16>
    %2 = vector.extract_strided_slice %0 {offsets = [0, 0], sizes = [1, 256], strides = [1, 1]} : vector<5x256xf32> to vector<1x256xf32>
    %3 = vector.shape_cast %2 : vector<1x256xf32> to vector<256xf32>
    %c0_3 = arith.constant 0 : index
    %c0_4 = arith.constant 0 : index
    %4 = vector.load %arg2[%c0_3, %c0_4] : memref<128x256xbf16, #tpu.memory_space<vmem>>, vector<128x256xbf16>
    %cst = arith.constant dense<0.000000e+00> : vector<8x256xf32>
    %5 = tpu.matmul %1, %4, %cst {dimension_numbers = #tpu.dot_dimension_numbers<[1], [0], [0], [1], [0, 0, 1, 1], [], []>} : vector<8x128xbf16>, vector<128x256xbf16>, vector<8x256xf32> -> vector<8x256xf32>
    %6 = vector.shape_cast %3 : vector<256xf32> to vector<1x256xf32>
    %7 = vector.broadcast %6 : vector<1x256xf32> to vector<8x256xf32>
    %8 = arith.addf %5, %7 : vector<8x256xf32>
    %cst_5 = arith.constant 0.000000e+00 : f32
    %9 = vector.broadcast %cst_5 : f32 to vector<8x256xf32>
    %10 = arith.maximumf %8, %9 : vector<8x256xf32>
    %11 = arith.truncf %10 : vector<8x256xf32> to vector<8x256xbf16>
    %12 = vector.extract_strided_slice %0 {offsets = [1, 0], sizes = [1, 256], strides = [1, 1]} : vector<5x256xf32> to vector<1x256xf32>
    %13 = vector.shape_cast %12 : vector<1x256xf32> to vector<256xf32>
    %c0_6 = arith.constant 0 : index
    %c0_7 = arith.constant 0 : index
    %14 = vector.load %arg3[%c0_6, %c0_7] : memref<256x256xbf16, #tpu.memory_space<vmem>>, vector<256x256xbf16>
    %cst_8 = arith.constant dense<0.000000e+00> : vector<8x256xf32>
    %15 = tpu.matmul %11, %14, %cst_8 {dimension_numbers = #tpu.dot_dimension_numbers<[1], [0], [0], [1], [0, 0, 1, 1], [], []>} : vector<8x256xbf16>, vector<256x256xbf16>, vector<8x256xf32> -> vector<8x256xf32>
    %16 = vector.shape_cast %13 : vector<256xf32> to vector<1x256xf32>
    %17 = vector.broadcast %16 : vector<1x256xf32> to vector<8x256xf32>
    %18 = arith.addf %15, %17 : vector<8x256xf32>
    %cst_9 = arith.constant 0.000000e+00 : f32
    %19 = vector.broadcast %cst_9 : f32 to vector<8x256xf32>
    %20 = arith.maximumf %18, %19 : vector<8x256xf32>
    %21 = arith.truncf %20 : vector<8x256xf32> to vector<8x256xbf16>
    %22 = vector.extract_strided_slice %0 {offsets = [2, 0], sizes = [1, 256], strides = [1, 1]} : vector<5x256xf32> to vector<1x256xf32>
    %23 = vector.shape_cast %22 : vector<1x256xf32> to vector<256xf32>
    %c0_10 = arith.constant 0 : index
    %c0_11 = arith.constant 0 : index
    %24 = vector.load %arg4[%c0_10, %c0_11] : memref<256x256xbf16, #tpu.memory_space<vmem>>, vector<256x256xbf16>
    %cst_12 = arith.constant dense<0.000000e+00> : vector<8x256xf32>
    %25 = tpu.matmul %21, %24, %cst_12 {dimension_numbers = #tpu.dot_dimension_numbers<[1], [0], [0], [1], [0, 0, 1, 1], [], []>} : vector<8x256xbf16>, vector<256x256xbf16>, vector<8x256xf32> -> vector<8x256xf32>
    %26 = vector.shape_cast %23 : vector<256xf32> to vector<1x256xf32>
    %27 = vector.broadcast %26 : vector<1x256xf32> to vector<8x256xf32>
    %28 = arith.addf %25, %27 : vector<8x256xf32>
    %cst_13 = arith.constant 0.000000e+00 : f32
    %29 = vector.broadcast %cst_13 : f32 to vector<8x256xf32>
    %30 = arith.maximumf %28, %29 : vector<8x256xf32>
    %31 = arith.truncf %30 : vector<8x256xf32> to vector<8x256xbf16>
    %32 = vector.extract_strided_slice %0 {offsets = [3, 0], sizes = [1, 256], strides = [1, 1]} : vector<5x256xf32> to vector<1x256xf32>
    %33 = vector.shape_cast %32 : vector<1x256xf32> to vector<256xf32>
    %c0_14 = arith.constant 0 : index
    %c0_15 = arith.constant 0 : index
    %34 = vector.load %arg5[%c0_14, %c0_15] : memref<256x256xbf16, #tpu.memory_space<vmem>>, vector<256x256xbf16>
    %cst_16 = arith.constant dense<0.000000e+00> : vector<8x256xf32>
    %35 = tpu.matmul %31, %34, %cst_16 {dimension_numbers = #tpu.dot_dimension_numbers<[1], [0], [0], [1], [0, 0, 1, 1], [], []>} : vector<8x256xbf16>, vector<256x256xbf16>, vector<8x256xf32> -> vector<8x256xf32>
    %36 = vector.shape_cast %33 : vector<256xf32> to vector<1x256xf32>
    %37 = vector.broadcast %36 : vector<1x256xf32> to vector<8x256xf32>
    %38 = arith.addf %35, %37 : vector<8x256xf32>
    %cst_17 = arith.constant 0.000000e+00 : f32
    %39 = vector.broadcast %cst_17 : f32 to vector<8x256xf32>
    %40 = arith.maximumf %38, %39 : vector<8x256xf32>
    %41 = arith.truncf %40 : vector<8x256xf32> to vector<8x256xbf16>
    %42 = vector.extract_strided_slice %0 {offsets = [4, 0], sizes = [1, 128], strides = [1, 1]} : vector<5x256xf32> to vector<1x128xf32>
    %43 = vector.shape_cast %42 : vector<1x128xf32> to vector<128xf32>
    %c0_18 = arith.constant 0 : index
    %c0_19 = arith.constant 0 : index
    %44 = vector.load %arg6[%c0_18, %c0_19] : memref<256x128xbf16, #tpu.memory_space<vmem>>, vector<256x128xbf16>
    %cst_20 = arith.constant dense<0.000000e+00> : vector<8x128xf32>
    %45 = tpu.matmul %41, %44, %cst_20 {dimension_numbers = #tpu.dot_dimension_numbers<[1], [0], [0], [1], [0, 0, 1, 1], [], []>} : vector<8x256xbf16>, vector<256x128xbf16>, vector<8x128xf32> -> vector<8x128xf32>
    %46 = vector.shape_cast %43 : vector<128xf32> to vector<1x128xf32>
    %47 = vector.broadcast %46 : vector<1x128xf32> to vector<8x128xf32>
    %48 = arith.addf %45, %47 : vector<8x128xf32>
    %cst_21 = arith.constant 0.000000e+00 : f32
    %49 = vector.broadcast %cst_21 : f32 to vector<8x128xf32>
    %50 = arith.maximumf %48, %49 : vector<8x128xf32>
    %c0_22 = arith.constant 0 : index
    %c0_23 = arith.constant 0 : index
    %51 = vector.load %arg8[%c0_22, %c0_23] : memref<8x128xf32, #tpu.memory_space<vmem>>, vector<8x128xf32>
    tpu.vector_store %arg8[%c0_22, %c0_23], %50 {strides = array<i32>} : memref<8x128xf32, #tpu.memory_space<vmem>>, vector<8x128xf32>,
    return
  }
  func.func @transform_0(%arg0: i32) -> (i32, i32) {
    %c0_i32 = arith.constant 0 : i32
    %c0_i32_0 = arith.constant 0 : i32
    return %arg0, %c0_i32 : i32, i32
  }
  func.func @transform_1(%arg0: i32) -> (i32, i32) {
    %c0_i32 = arith.constant 0 : i32
    %c0_i32_0 = arith.constant 0 : i32
    %c0_i32_1 = arith.constant 0 : i32
    return %c0_i32, %c0_i32_0 : i32, i32
  }
  func.func @transform_2(%arg0: i32) -> (i32, i32) {
    %c0_i32 = arith.constant 0 : i32
    %c0_i32_0 = arith.constant 0 : i32
    %c0_i32_1 = arith.constant 0 : i32
    return %c0_i32, %c0_i32_0 : i32, i32
  }
  func.func @transform_3(%arg0: i32) -> (i32, i32) {
    %c0_i32 = arith.constant 0 : i32
    %c0_i32_0 = arith.constant 0 : i32
    %c0_i32_1 = arith.constant 0 : i32
    return %c0_i32, %c0_i32_0 : i32, i32
  }
  func.func @transform_4(%arg0: i32) -> (i32, i32) {
    %c0_i32 = arith.constant 0 : i32
    %c0_i32_0 = arith.constant 0 : i32
    %c0_i32_1 = arith.constant 0 : i32
    return %c0_i32, %c0_i32_0 : i32, i32
  }
  func.func @transform_5(%arg0: i32) -> (i32, i32) {
    %c0_i32 = arith.constant 0 : i32
    %c0_i32_0 = arith.constant 0 : i32
    %c0_i32_1 = arith.constant 0 : i32
    return %c0_i32, %c0_i32_0 : i32, i32
  }
  func.func @transform_6(%arg0: i32) -> (i32, i32) {
    %c0_i32 = arith.constant 0 : i32
    %c0_i32_0 = arith.constant 0 : i32
    %c0_i32_1 = arith.constant 0 : i32
    return %c0_i32, %c0_i32_0 : i32, i32
  }
  func.func @transform_7(%arg0: i32) -> (i32, i32) {
    %c0_i32 = arith.constant 0 : i32
    %c0_i32_0 = arith.constant 0 : i32
    return %arg0, %c0_i32 : i32, i32
  }
}

</mosaic_0001>

<llo_original>
// kernel: tpu_custom_call.1
$region0: #{tpu_custom_call.1}
  #allocation0 [shape = 'u32[]', space=smem, size = 0x4, offset = 0x4, fixed_abs, tag = 'smem constant byte address 0x4 - core index']
  #allocation1 [shape = 'u32[144,128]{1,0:T(1,128)}', space=vmem, size = 0x12000, scoped, tag = 'internal scratch']
  %s0 = inlined_call_operand.hbm [shape: bf16[8,128], index: 0, kind: input, shape index: {}]
  %s1 = inlined_call_operand.hbm [shape: bf16[128,256], index: 1, kind: input, shape index: {}]
  %s2 = inlined_call_operand.hbm [shape: bf16[256,256], index: 2, kind: input, shape index: {}]
  %s3 = inlined_call_operand.hbm [shape: bf16[256,256], index: 3, kind: input, shape index: {}]
  %s4 = inlined_call_operand.hbm [shape: bf16[256,256], index: 4, kind: input, shape index: {}]
  %s5 = inlined_call_operand.hbm [shape: bf16[256,128], index: 5, kind: input, shape index: {}]
  %s6 = inlined_call_operand.vmem [shape: f32[5,256], index: 6, kind: input, shape index: {}]
  %s7 = inlined_call_operand.hbm [shape: f32[8,128], index: 7, kind: output, shape index: {}]
  %s8 = sld [smem:[#allocation0]]
  $region62: #{tpu_custom_call.1} parent=0
    _
  %s10 = ssub.s32 1, %s8
  %s11 = scalar_select 0, %s10, %s8
  $region1: #{tpu_custom_call.1} parent=0
    #allocation2 [shape = 'u8[2048]{0}', space=vmem, size = 0x800, scoped, tag = 'input window, operand 0, single buffered']
    #allocation3 [shape = 's32[1]{0}', space=sflag, size = 0x4, scoped, tag = 'scoped memory for tpu_custom_call.1']
    #allocation4 [shape = 's32[1]{0}', space=sflag, size = 0x4, scoped, tag = 'scoped memory for tpu_custom_call.1']
    #allocation5 [shape = 'u8[65536]{0}', space=vmem, size = 0x10000, scoped, tag = 'input window, operand 1, single buffered']
    #allocation6 [shape = 's32[1]{0}', space=sflag, size = 0x4, scoped, tag = 'scoped memory for tpu_custom_call.1']
    #allocation7 [shape = 'u8[131072]{0}', space=vmem, size = 0x20000, scoped, tag = 'input window, operand 2, single buffered']
    #allocation8 [shape = 'u8[131072]{0}', space=vmem, size = 0x20000, scoped, tag = 'input window, operand 3, single buffered']
    #allocation9 [shape = 's32[1]{0}', space=sflag, size = 0x4, scoped, tag = 'scoped memory for tpu_custom_call.1']
    #allocation10 [shape = 'u8[131072]{0}', space=vmem, size = 0x20000, scoped, tag = 'input window, operand 4, single buffered']
    #allocation11 [shape = 'u8[65536]{0}', space=vmem, size = 0x10000, scoped, tag = 'input window, operand 5, single buffered']
    #allocation12 [shape = 's32[1]{0}', space=sflag, size = 0x4, scoped, tag = 'scoped memory for tpu_custom_call.1']
    #allocation13 [shape = 'u8[4096]{0}', space=vmem, size = 0x1000, scoped, tag = 'output window, operand 0, single buffered']
    %12 = vsyncpa [#allocation3], 0
    %13 = vsyncpa [#allocation6], 0
    %14 = vsyncpa [#allocation9], 0
    %15 = vsyncpa [#allocation12], 0
    %16 = vsyncpa [#allocation4], 0
    // Predicated region
    $region2: #{tpu_custom_call.1} parent=1 // pred_check
      _
    $region3: #{tpu_custom_call.1} parent=1 // pred_check_branch
      %18 = sbr.rel (0) target = $region5
    $region4: #{tpu_custom_call.1} parent=1 // pred_region
      %s20 = ssub.s32 64, 64
      %21 = vsyncadd [#allocation3], %s20
      %s23 = sshll.u32 [#allocation2], 4
      %s24 = int_to_ptr.vmem [resolvable:$true] %s23
      %26 = dma.hbm_to_vmem [thread:$0]  %s0, 64, %s24, [#allocation3]
    $region5: #{tpu_custom_call.1} parent=1 // pred_fallthru
      _
    // Predicated region
    $region6: #{tpu_custom_call.1} parent=1 // pred_check
      _
    $region7: #{tpu_custom_call.1} parent=1 // pred_check_branch
      %28 = sbr.rel (0) target = $region9
    $region8: #{tpu_custom_call.1} parent=1 // pred_region
      %s30 = ssub.s32 2048, 2048
      %31 = vsyncadd [#allocation6], %s30
      %s32 = sshll.u32 [#allocation5], 4
      %s33 = int_to_ptr.vmem [resolvable:$true] %s32
      %38 = dma.hbm_to_vmem [thread:$0]  %s1, 2048, %s33, [#allocation6], 128, 128, 8
    $region9: #{tpu_custom_call.1} parent=1 // pred_fallthru
      _
    // Predicated region
    $region10: #{tpu_custom_call.1} parent=1 // pred_check
      _
    $region11: #{tpu_custom_call.1} parent=1 // pred_check_branch
      %40 = sbr.rel (0) target = $region13
    $region12: #{tpu_custom_call.1} parent=1 // pred_region
      %s42 = ssub.s32 4096, 4096
      %43 = vsyncadd [#allocation6], %s42
      %s44 = sshll.u32 [#allocation7], 4
      %s45 = int_to_ptr.vmem [resolvable:$true] %s44
      %50 = dma.hbm_to_vmem [thread:$0]  %s2, 4096, %s45, [#allocation6], 128, 128, 8
    $region13: #{tpu_custom_call.1} parent=1 // pred_fallthru
      _
    // Predicated region
    $region14: #{tpu_custom_call.1} parent=1 // pred_check
      _
    $region15: #{tpu_custom_call.1} parent=1 // pred_check_branch
      %52 = sbr.rel (0) target = $region17
    $region16: #{tpu_custom_call.1} parent=1 // pred_region
      %s54 = ssub.s32 4096, 4096
      %55 = vsyncadd [#allocation9], %s54
      %s56 = sshll.u32 [#allocation8], 4
      %s57 = int_to_ptr.vmem [resolvable:$true] %s56
      %62 = dma.hbm_to_vmem [thread:$0]  %s3, 4096, %s57, [#allocation9], 128, 128, 8
    $region17: #{tpu_custom_call.1} parent=1 // pred_fallthru
      _
    // Predicated region
    $region18: #{tpu_custom_call.1} parent=1 // pred_check
      _
    $region19: #{tpu_custom_call.1} parent=1 // pred_check_branch
      %64 = sbr.rel (0) target = $region21
    $region20: #{tpu_custom_call.1} parent=1 // pred_region
      %s66 = ssub.s32 4096, 4096
      %67 = vsyncadd [#allocation9], %s66
      %s68 = sshll.u32 [#allocation10], 4
      %s69 = int_to_ptr.vmem [resolvable:$true] %s68
      %74 = dma.hbm_to_vmem [thread:$0]  %s4, 4096, %s69, [#allocation9], 128, 128, 8
    $region21: #{tpu_custom_call.1} parent=1 // pred_fallthru
      _
    // Predicated region
    $region22: #{tpu_custom_call.1} parent=1 // pred_check
      _
    $region23: #{tpu_custom_call.1} parent=1 // pred_check_branch
      %76 = sbr.rel (0) target = $region25
    $region24: #{tpu_custom_call.1} parent=1 // pred_region
      %s78 = ssub.s32 2048, 2048
      %79 = vsyncadd [#allocation12], %s78
      %s80 = sshll.u32 [#allocation11], 4
      %s81 = int_to_ptr.vmem [resolvable:$true] %s80
      %86 = dma.hbm_to_vmem [thread:$0]  %s5, 2048, %s81, [#allocation12], 64, 64, 4
    $region25: #{tpu_custom_call.1} parent=1 // pred_fallthru
      _
    // Predicated region
    $region26: #{tpu_custom_call.1} parent=1 // pred_check
      _
    $region27: #{tpu_custom_call.1} parent=1 // pred_check_branch
      %88 = sbr.rel (0) target = $region29
    $region28: #{tpu_custom_call.1} parent=1 // pred_region
      _
    $region29: #{tpu_custom_call.1} parent=1 // pred_fallthru
      _
    // Predicated region
    $region30: #{tpu_custom_call.1} parent=1 // pred_check
      _
    $region31: #{tpu_custom_call.1} parent=1 // pred_check_branch
      %90 = sbr.rel (0) target = $region33
    $region32: #{tpu_custom_call.1} parent=1 // pred_region
      %91 = dma.done [#allocation3], 64
    $region33: #{tpu_custom_call.1} parent=1 // pred_fallthru
      _
    // Predicated region
    $region34: #{tpu_custom_call.1} parent=1 // pred_check
      _
    $region35: #{tpu_custom_call.1} parent=1 // pred_check_branch
      %93 = sbr.rel (0) target = $region37
    $region36: #{tpu_custom_call.1} parent=1 // pred_region
      %94 = dma.done [#allocation6], 2048
    $region37: #{tpu_custom_call.1} parent=1 // pred_fallthru
      _
    // Predicated region
    $region38: #{tpu_custom_call.1} parent=1 // pred_check
      _
    $region39: #{tpu_custom_call.1} parent=1 // pred_check_branch
      %96 = sbr.rel (0) target = $region41
    $region40: #{tpu_custom_call.1} parent=1 // pred_region
      %97 = dma.done [#allocation6], 4096
    $region41: #{tpu_custom_call.1} parent=1 // pred_fallthru
      _
    // Predicated region
    $region42: #{tpu_custom_call.1} parent=1 // pred_check
      _
    $region43: #{tpu_custom_call.1} parent=1 // pred_check_branch
      %99 = sbr.rel (0) target = $region45
    $region44: #{tpu_custom_call.1} parent=1 // pred_region
      %100 = dma.done [#allocation9], 4096
    $region45: #{tpu_custom_call.1} parent=1 // pred_fallthru
      _
    // Predicated region
    $region46: #{tpu_custom_call.1} parent=1 // pred_check
      _
    $region47: #{tpu_custom_call.1} parent=1 // pred_check_branch
      %102 = sbr.rel (0) target = $region49
    $region48: #{tpu_custom_call.1} parent=1 // pred_region
      %103 = dma.done [#allocation9], 4096
    $region49: #{tpu_custom_call.1} parent=1 // pred_fallthru
      _
    // Predicated region
    $region50: #{tpu_custom_call.1} parent=1 // pred_check
      _
    $region51: #{tpu_custom_call.1} parent=1 // pred_check_branch
      %105 = sbr.rel (0) target = $region53
    $region52: #{tpu_custom_call.1} parent=1 // pred_region
      %106 = dma.done [#allocation12], 2048
    $region53: #{tpu_custom_call.1} parent=1 // pred_fallthru
      _
    %v108 = vld [vmem:[%s6] sm:$0x1f]
    %v109 = vld [vmem:[%s6 + $0x8] sm:$0x1f]
    %v110 = vld [vmem:[#allocation2] sm:$0xf]
    %v111 = vld [vmem:[#allocation5] sm:$0xff]
    %v112 = vld [vmem:[#allocation5 + $0x8] sm:$0xff]
    %v113 = vld [vmem:[#allocation5 + $0x10] sm:$0xff]
    %v114 = vld [vmem:[#allocation5 + $0x18] sm:$0xff]
    %v115 = vld [vmem:[#allocation5 + $0x20] sm:$0xff]
    %v116 = vld [vmem:[#allocation5 + $0x28] sm:$0xff]
    %v117 = vld [vmem:[#allocation5 + $0x30] sm:$0xff]
    %v118 = vld [vmem:[#allocation5 + $0x38] sm:$0xff]
    %v119 = vld [vmem:[#allocation5 + $0x40] sm:$0xff]
    %v120 = vld [vmem:[#allocation5 + $0x48] sm:$0xff]
    %v121 = vld [vmem:[#allocation5 + $0x50] sm:$0xff]
    %v122 = vld [vmem:[#allocation5 + $0x58] sm:$0xff]
    %v123 = vld [vmem:[#allocation5 + $0x60] sm:$0xff]
    %v124 = vld [vmem:[#allocation5 + $0x68] sm:$0xff]
    %v125 = vld [vmem:[#allocation5 + $0x70] sm:$0xff]
    %v126 = vld [vmem:[#allocation5 + $0x78] sm:$0xff]
    %v127 = vlaneseq
    %v128 = vshrl.u32 %v127, 7
    %v129 = vsub.s32 0, %v128
    %v130 = vrot.slane %v108, %v129
    %v131 = vlaneseq
    %v132 = vshrl.u32 %v131, 7
    %v133 = vsub.s32 0, %v132
    %v134 = vrot.slane %v109, %v133
    %v151 = vunpack.c.l.b16 %v111
    %v152 = vunpack.c.h.b16 %v111
    %v153 = vunpack.c.l.b16 %v112
    %v154 = vunpack.c.h.b16 %v112
    %v155 = vunpack.c.l.b16 %v113
    %v156 = vunpack.c.h.b16 %v113
    %v157 = vunpack.c.l.b16 %v114
    %v158 = vunpack.c.h.b16 %v114
    %v159 = vunpack.c.l.b16 %v115
    %v160 = vunpack.c.h.b16 %v115
    %v161 = vunpack.c.l.b16 %v116
    %v162 = vunpack.c.h.b16 %v116
    %v163 = vunpack.c.l.b16 %v117
    %v164 = vunpack.c.h.b16 %v117
    %v165 = vunpack.c.l.b16 %v118
    %v166 = vunpack.c.h.b16 %v118
    %v167 = vunpack.c.l.b16 %v119
    %v168 = vunpack.c.h.b16 %v119
    %v169 = vunpack.c.l.b16 %v120
    %v170 = vunpack.c.h.b16 %v120
    %v171 = vunpack.c.l.b16 %v121
    %v172 = vunpack.c.h.b16 %v121
    %v173 = vunpack.c.l.b16 %v122
    %v174 = vunpack.c.h.b16 %v122
    %v175 = vunpack.c.l.b16 %v123
    %v176 = vunpack.c.h.b16 %v123
    %v177 = vunpack.c.l.b16 %v124
    %v178 = vunpack.c.h.b16 %v124
    %v179 = vunpack.c.l.b16 %v125
    %v180 = vunpack.c.h.b16 %v125
    %v181 = vunpack.c.l.b16 %v126
    %v182 = vunpack.c.h.b16 %v126
    %v183 = vpack.c.b16 %v153, %v151
    %v184 = vpack.c.b16 %v154, %v152
    %v185 = vpack.c.b16 %v157, %v155
    %v186 = vpack.c.b16 %v158, %v156
    %v187 = vpack.c.b16 %v161, %v159
    %v188 = vpack.c.b16 %v162, %v160
    %v189 = vpack.c.b16 %v165, %v163
    %v190 = vpack.c.b16 %v166, %v164
    %v191 = vpack.c.b16 %v169, %v167
    %v192 = vpack.c.b16 %v170, %v168
    %v193 = vpack.c.b16 %v173, %v171
    %v194 = vpack.c.b16 %v174, %v172
    %v195 = vpack.c.b16 %v177, %v175
    %v196 = vpack.c.b16 %v178, %v176
    %v197 = vpack.c.b16 %v181, %v179
    %v198 = vpack.c.b16 %v182, %v180
    %215 = vmatprep.subr.bf16.mxu0 %v184
    %216 = vmatpush1.bf16.msra.mxu0 %v183
    %217 = vmatprep.subr.bf16.mxu0 %v186
    %218 = vmatpush1.bf16.msra.mxu0 %v185
    %219 = vmatprep.subr.bf16.mxu0 %v188
    %220 = vmatpush1.bf16.msra.mxu0 %v187
    %221 = vmatprep.subr.bf16.mxu0 %v190
    %222 = vmatpush1.bf16.msra.mxu0 %v189
    %223 = vmatprep.subr.bf16.mxu0 %v192
    %224 = vmatpush1.bf16.msra.mxu0 %v191
    %225 = vmatprep.subr.bf16.mxu0 %v194
    %226 = vmatpush1.bf16.msra.mxu0 %v193
    %227 = vmatprep.subr.bf16.mxu0 %v196
    %228 = vmatpush1.bf16.msra.mxu0 %v195
    %229 = vmatprep.subr.bf16.mxu0 %v198
    %230 = vmatpush1.bf16.msra.mxu0 %v197
    %231 = vmatprep.subr.bf16.mxu0 0
    %232 = vmatpush1.bf16.msra.mxu0 0
    %233 = vmatprep.subr.bf16.mxu0 0
    %234 = vmatpush1.bf16.msra.mxu0 0
    %235 = vmatprep.subr.bf16.mxu0 0
    %236 = vmatpush1.bf16.msra.mxu0 0
    %237 = vmatprep.subr.bf16.mxu0 0
    %238 = vmatpush1.bf16.msra.mxu0 0
    %239 = vmatprep.subr.bf16.mxu0 0
    %240 = vmatpush1.bf16.msra.mxu0 0
    %241 = vmatprep.subr.bf16.mxu0 0
    %242 = vmatpush1.bf16.msra.mxu0 0
    %243 = vmatprep.subr.bf16.mxu0 0
    %244 = vmatpush1.bf16.msra.mxu0 0
    %245 = vmatprep.subr.bf16.mxu0 0
    %246 = vmatpush1.bf16.msra.mxu0 0
    %247 = vmatprep.mubr.bf16.mxu0 0
    %248 = vmatmul.mubr.bf16.gmra.mrb[0].mxu0 %v110
    %v249 = vpop.f32.mrb[0].mxu0
    %v250 = vadd.f32 %v130, %v249
    %v251 = vpop.f32.mrb[0].mxu0
    %v252 = vadd.f32 %v134, %v251
    %v253 = vpop.f32.mrb[0].mxu0
    %v254 = vpop.f32.mrb[0].mxu0
    %255 = vdwg.mxu0
    %v256 = vmax.f32 %v250, 0.0
    %v257 = vmax.f32 %v252, 0.0
    %v258 = vpack.c.bf16 %v256, %v256
    %v259 = vpack.c.bf16 %v257, %v257
    %v260 = vld [vmem:[#allocation7] sm:$0xff]
    %v261 = vld [vmem:[#allocation7 + $0x8] sm:$0xff]
    %v262 = vld [vmem:[#allocation7 + $0x10] sm:$0xff]
    %v263 = vld [vmem:[#allocation7 + $0x18] sm:$0xff]
    %v264 = vld [vmem:[#allocation7 + $0x20] sm:$0xff]
    %v265 = vld [vmem:[#allocation7 + $0x28] sm:$0xff]
    %v266 = vld [vmem:[#allocation7 + $0x30] sm:$0xff]
    %v267 = vld [vmem:[#allocation7 + $0x38] sm:$0xff]
    %v268 = vld [vmem:[#allocation7 + $0x40] sm:$0xff]
    %v269 = vld [vmem:[#allocation7 + $0x48] sm:$0xff]
    %v270 = vld [vmem:[#allocation7 + $0x50] sm:$0xff]
    %v271 = vld [vmem:[#allocation7 + $0x58] sm:$0xff]
    %v272 = vld [vmem:[#allocation7 + $0x60] sm:$0xff]
    %v273 = vld [vmem:[#allocation7 + $0x68] sm:$0xff]
    %v274 = vld [vmem:[#allocation7 + $0x70] sm:$0xff]
    %v275 = vld [vmem:[#allocation7 + $0x78] sm:$0xff]
    %v276 = vld [vmem:[#allocation7 + $0x80] sm:$0xff]
    %v277 = vld [vmem:[#allocation7 + $0x88] sm:$0xff]
    %v278 = vld [vmem:[#allocation7 + $0x90] sm:$0xff]
    %v279 = vld [vmem:[#allocation7 + $0x98] sm:$0xff]
    %v280 = vld [vmem:[#allocation7 + $0xa0] sm:$0xff]
    %v281 = vld [vmem:[#allocation7 + $0xa8] sm:$0xff]
    %v282 = vld [vmem:[#allocation7 + $0xb0] sm:$0xff]
    %v283 = vld [vmem:[#allocation7 + $0xb8] sm:$0xff]
    %v284 = vld [vmem:[#allocation7 + $0xc0] sm:$0xff]
    %v285 = vld [vmem:[#allocation7 + $0xc8] sm:$0xff]
    %v286 = vld [vmem:[#allocation7 + $0xd0] sm:$0xff]
    %v287 = vld [vmem:[#allocation7 + $0xd8] sm:$0xff]
    %v288 = vld [vmem:[#allocation7 + $0xe0] sm:$0xff]
    %v289 = vld [vmem:[#allocation7 + $0xe8] sm:$0xff]
    %v290 = vld [vmem:[#allocation7 + $0xf0] sm:$0xff]
    %v291 = vld [vmem:[#allocation7 + $0xf8] sm:$0xff]
    %v292 = vlaneseq
    %v293 = vshrl.u32 %v292, 7
    %v294 = vsub.s32 1, %v293
    %v295 = vrot.slane %v108, %v294
    %v296 = vlaneseq
    %v297 = vshrl.u32 %v296, 7
    %v298 = vsub.s32 1, %v297
    %v299 = vrot.slane %v109, %v298
    %v332 = vunpack.c.l.b16 %v260
    %v333 = vunpack.c.h.b16 %v260
    %v334 = vunpack.c.l.b16 %v261
    %v335 = vunpack.c.h.b16 %v261
    %v336 = vunpack.c.l.b16 %v262
    %v337 = vunpack.c.h.b16 %v262
    %v338 = vunpack.c.l.b16 %v263
    %v339 = vunpack.c.h.b16 %v263
    %v340 = vunpack.c.l.b16 %v264
    %v341 = vunpack.c.h.b16 %v264
    %v342 = vunpack.c.l.b16 %v265
    %v343 = vunpack.c.h.b16 %v265
    %v344 = vunpack.c.l.b16 %v266
    %v345 = vunpack.c.h.b16 %v266
    %v346 = vunpack.c.l.b16 %v267
    %v347 = vunpack.c.h.b16 %v267
    %v348 = vunpack.c.l.b16 %v268
    %v349 = vunpack.c.h.b16 %v268
    %v350 = vunpack.c.l.b16 %v269
    %v351 = vunpack.c.h.b16 %v269
    %v352 = vunpack.c.l.b16 %v270
    %v353 = vunpack.c.h.b16 %v270
    %v354 = vunpack.c.l.b16 %v271
    %v355 = vunpack.c.h.b16 %v271
    %v356 = vunpack.c.l.b16 %v272
    %v357 = vunpack.c.h.b16 %v272
    %v358 = vunpack.c.l.b16 %v273
    %v359 = vunpack.c.h.b16 %v273
    %v360 = vunpack.c.l.b16 %v274
    %v361 = vunpack.c.h.b16 %v274
    %v362 = vunpack.c.l.b16 %v275
    %v363 = vunpack.c.h.b16 %v275
    %v364 = vunpack.c.l.b16 %v276
    %v365 = vunpack.c.h.b16 %v276
    %v366 = vunpack.c.l.b16 %v277
    %v367 = vunpack.c.h.b16 %v277
    %v368 = vunpack.c.l.b16 %v278
    %v369 = vunpack.c.h.b16 %v278
    %v370 = vunpack.c.l.b16 %v279
    %v371 = vunpack.c.h.b16 %v279
    %v372 = vunpack.c.l.b16 %v280
    %v373 = vunpack.c.h.b16 %v280
    %v374 = vunpack.c.l.b16 %v281
    %v375 = vunpack.c.h.b16 %v281
    %v376 = vunpack.c.l.b16 %v282
    %v377 = vunpack.c.h.b16 %v282
    %v378 = vunpack.c.l.b16 %v283
    %v379 = vunpack.c.h.b16 %v283
    %v380 = vunpack.c.l.b16 %v284
    %v381 = vunpack.c.h.b16 %v284
    %v382 = vunpack.c.l.b16 %v285
    %v383 = vunpack.c.h.b16 %v285
    %v384 = vunpack.c.l.b16 %v286
    %v385 = vunpack.c.h.b16 %v286
    %v386 = vunpack.c.l.b16 %v287
    %v387 = vunpack.c.h.b16 %v287
    %v388 = vunpack.c.l.b16 %v288
    %v389 = vunpack.c.h.b16 %v288
    %v390 = vunpack.c.l.b16 %v289
    %v391 = vunpack.c.h.b16 %v289
    %v392 = vunpack.c.l.b16 %v290
    %v393 = vunpack.c.h.b16 %v290
    %v394 = vunpack.c.l.b16 %v291
    %v395 = vunpack.c.h.b16 %v291
    %v396 = vpack.c.b16 %v334, %v332
    %v397 = vpack.c.b16 %v335, %v333
    %v398 = vpack.c.b16 %v338, %v336
    %v399 = vpack.c.b16 %v339, %v337
    %v400 = vpack.c.b16 %v342, %v340
    %v401 = vpack.c.b16 %v343, %v341
    %v402 = vpack.c.b16 %v346, %v344
    %v403 = vpack.c.b16 %v347, %v345
    %v404 = vpack.c.b16 %v350, %v348
    %v405 = vpack.c.b16 %v351, %v349
    %v406 = vpack.c.b16 %v354, %v352
    %v407 = vpack.c.b16 %v355, %v353
    %v408 = vpack.c.b16 %v358, %v356
    %v409 = vpack.c.b16 %v359, %v357
    %v410 = vpack.c.b16 %v362, %v360
    %v411 = vpack.c.b16 %v363, %v361
    %v412 = vpack.c.b16 %v366, %v364
    %v413 = vpack.c.b16 %v367, %v365
    %v414 = vpack.c.b16 %v370, %v368
    %v415 = vpack.c.b16 %v371, %v369
    %v416 = vpack.c.b16 %v374, %v372
    %v417 = vpack.c.b16 %v375, %v373
    %v418 = vpack.c.b16 %v378, %v376
    %v419 = vpack.c.b16 %v379, %v377
    %v420 = vpack.c.b16 %v382, %v380
    %v421 = vpack.c.b16 %v383, %v381
    %v422 = vpack.c.b16 %v386, %v384
    %v423 = vpack.c.b16 %v387, %v385
    %v424 = vpack.c.b16 %v390, %v388
    %v425 = vpack.c.b16 %v391, %v389
    %v426 = vpack.c.b16 %v394, %v392
    %v427 = vpack.c.b16 %v395, %v393
    %460 = vmatprep.subr.bf16.mxu0 %v397
    %461 = vmatpush1.bf16.msra.mxu0 %v396
    %462 = vmatprep.subr.bf16.mxu0 %v399
    %463 = vmatpush1.bf16.msra.mxu0 %v398
    %464 = vmatprep.subr.bf16.mxu0 %v401
    %465 = vmatpush1.bf16.msra.mxu0 %v400
    %466 = vmatprep.subr.bf16.mxu0 %v403
    %467 = vmatpush1.bf16.msra.mxu0 %v402
    %468 = vmatprep.subr.bf16.mxu0 %v405
    %469 = vmatpush1.bf16.msra.mxu0 %v404
    %470 = vmatprep.subr.bf16.mxu0 %v407
    %471 = vmatpush1.bf16.msra.mxu0 %v406
    %472 = vmatprep.subr.bf16.mxu0 %v409
    %473 = vmatpush1.bf16.msra.mxu0 %v408
    %474 = vmatprep.subr.bf16.mxu0 %v411
    %475 = vmatpush1.bf16.msra.mxu0 %v410
    %476 = vmatprep.subr.bf16.mxu0 %v413
    %477 = vmatpush1.bf16.msra.mxu0 %v412
    %478 = vmatprep.subr.bf16.mxu0 %v415
    %479 = vmatpush1.bf16.msra.mxu0 %v414
    %480 = vmatprep.subr.bf16.mxu0 %v417
    %481 = vmatpush1.bf16.msra.mxu0 %v416
    %482 = vmatprep.subr.bf16.mxu0 %v419
    %483 = vmatpush1.bf16.msra.mxu0 %v418
    %484 = vmatprep.subr.bf16.mxu0 %v421
    %485 = vmatpush1.bf16.msra.mxu0 %v420
    %486 = vmatprep.subr.bf16.mxu0 %v423
    %487 = vmatpush1.bf16.msra.mxu0 %v422
    %488 = vmatprep.subr.bf16.mxu0 %v425
    %489 = vmatpush1.bf16.msra.mxu0 %v424
    %490 = vmatprep.subr.bf16.mxu0 %v427
    %491 = vmatpush1.bf16.msra.mxu0 %v426
    %492 = vmatprep.mubr.bf16.mxu0 %v259
    %493 = vmatmul.mubr.bf16.gmra.mrb[0].mxu0 %v258
    %v494 = vpop.f32.mrb[0].mxu0
    %v495 = vadd.f32 %v295, %v494
    %v496 = vpop.f32.mrb[0].mxu0
    %v497 = vadd.f32 %v299, %v496
    %v498 = vpop.f32.mrb[0].mxu0
    %v499 = vpop.f32.mrb[0].mxu0
    %500 = vdwg.mxu0
    %v501 = vmax.f32 %v495, 0.0
    %v502 = vmax.f32 %v497, 0.0
    %v503 = vpack.c.bf16 %v501, %v501
    %v504 = vpack.c.bf16 %v502, %v502
    %v505 = vld [vmem:[#allocation8] sm:$0xff]
    %v506 = vld [vmem:[#allocation8 + $0x8] sm:$0xff]
    %v507 = vld [vmem:[#allocation8 + $0x10] sm:$0xff]
    %v508 = vld [vmem:[#allocation8 + $0x18] sm:$0xff]
    %v509 = vld [vmem:[#allocation8 + $0x20] sm:$0xff]
    %v510 = vld [vmem:[#allocation8 + $0x28] sm:$0xff]
    %v511 = vld [vmem:[#allocation8 + $0x30] sm:$0xff]
    %v512 = vld [vmem:[#allocation8 + $0x38] sm:$0xff]
    %v513 = vld [vmem:[#allocation8 + $0x40] sm:$0xff]
    %v514 = vld [vmem:[#allocation8 + $0x48] sm:$0xff]
    %v515 = vld [vmem:[#allocation8 + $0x50] sm:$0xff]
    %v516 = vld [vmem:[#allocation8 + $0x58] sm:$0xff]
    %v517 = vld [vmem:[#allocation8 + $0x60] sm:$0xff]
    %v518 = vld [vmem:[#allocation8 + $0x68] sm:$0xff]
    %v519 = vld [vmem:[#allocation8 + $0x70] sm:$0xff]
    %v520 = vld [vmem:[#allocation8 + $0x78] sm:$0xff]
    %v521 = vld [vmem:[#allocation8 + $0x80] sm:$0xff]
    %v522 = vld [vmem:[#allocation8 + $0x88] sm:$0xff]
    %v523 = vld [vmem:[#allocation8 + $0x90] sm:$0xff]
    %v524 = vld [vmem:[#allocation8 + $0x98] sm:$0xff]
    %v525 = vld [vmem:[#allocation8 + $0xa0] sm:$0xff]
    %v526 = vld [vmem:[#allocation8 + $0xa8] sm:$0xff]
    %v527 = vld [vmem:[#allocation8 + $0xb0] sm:$0xff]
    %v528 = vld [vmem:[#allocation8 + $0xb8] sm:$0xff]
    %v529 = vld [vmem:[#allocation8 + $0xc0] sm:$0xff]
    %v530 = vld [vmem:[#allocation8 + $0xc8] sm:$0xff]
    %v531 = vld [vmem:[#allocation8 + $0xd0] sm:$0xff]
    %v532 = vld [vmem:[#allocation8 + $0xd8] sm:$0xff]
    %v533 = vld [vmem:[#allocation8 + $0xe0] sm:$0xff]
    %v534 = vld [vmem:[#allocation8 + $0xe8] sm:$0xff]
    %v535 = vld [vmem:[#allocation8 + $0xf0] sm:$0xff]
    %v536 = vld [vmem:[#allocation8 + $0xf8] sm:$0xff]
    %v537 = vlaneseq
    %v538 = vshrl.u32 %v537, 7
    %v539 = vsub.s32 2, %v538
    %v540 = vrot.slane %v108, %v539
    %v541 = vlaneseq
    %v542 = vshrl.u32 %v541, 7
    %v543 = vsub.s32 2, %v542
    %v544 = vrot.slane %v109, %v543
    %v577 = vunpack.c.l.b16 %v505
    %v578 = vunpack.c.h.b16 %v505
    %v579 = vunpack.c.l.b16 %v506
    %v580 = vunpack.c.h.b16 %v506
    %v581 = vunpack.c.l.b16 %v507
    %v582 = vunpack.c.h.b16 %v507
    %v583 = vunpack.c.l.b16 %v508
    %v584 = vunpack.c.h.b16 %v508
    %v585 = vunpack.c.l.b16 %v509
    %v586 = vunpack.c.h.b16 %v509
    %v587 = vunpack.c.l.b16 %v510
    %v588 = vunpack.c.h.b16 %v510
    %v589 = vunpack.c.l.b16 %v511
    %v590 = vunpack.c.h.b16 %v511
    %v591 = vunpack.c.l.b16 %v512
    %v592 = vunpack.c.h.b16 %v512
    %v593 = vunpack.c.l.b16 %v513
    %v594 = vunpack.c.h.b16 %v513
    %v595 = vunpack.c.l.b16 %v514
    %v596 = vunpack.c.h.b16 %v514
    %v597 = vunpack.c.l.b16 %v515
    %v598 = vunpack.c.h.b16 %v515
    %v599 = vunpack.c.l.b16 %v516
    %v600 = vunpack.c.h.b16 %v516
    %v601 = vunpack.c.l.b16 %v517
    %v602 = vunpack.c.h.b16 %v517
    %v603 = vunpack.c.l.b16 %v518
    %v604 = vunpack.c.h.b16 %v518
    %v605 = vunpack.c.l.b16 %v519
    %v606 = vunpack.c.h.b16 %v519
    %v607 = vunpack.c.l.b16 %v520
    %v608 = vunpack.c.h.b16 %v520
    %v609 = vunpack.c.l.b16 %v521
    %v610 = vunpack.c.h.b16 %v521
    %v611 = vunpack.c.l.b16 %v522
    %v612 = vunpack.c.h.b16 %v522
    %v613 = vunpack.c.l.b16 %v523
    %v614 = vunpack.c.h.b16 %v523
    %v615 = vunpack.c.l.b16 %v524
    %v616 = vunpack.c.h.b16 %v524
    %v617 = vunpack.c.l.b16 %v525
    %v618 = vunpack.c.h.b16 %v525
    %v619 = vunpack.c.l.b16 %v526
    %v620 = vunpack.c.h.b16 %v526
    %v621 = vunpack.c.l.b16 %v527
    %v622 = vunpack.c.h.b16 %v527
    %v623 = vunpack.c.l.b16 %v528
    %v624 = vunpack.c.h.b16 %v528
    %v625 = vunpack.c.l.b16 %v529
    %v626 = vunpack.c.h.b16 %v529
    %v627 = vunpack.c.l.b16 %v530
    %v628 = vunpack.c.h.b16 %v530
    %v629 = vunpack.c.l.b16 %v531
    %v630 = vunpack.c.h.b16 %v531
    %v631 = vunpack.c.l.b16 %v532
    %v632 = vunpack.c.h.b16 %v532
    %v633 = vunpack.c.l.b16 %v533
    %v634 = vunpack.c.h.b16 %v533
    %v635 = vunpack.c.l.b16 %v534
    %v636 = vunpack.c.h.b16 %v534
    %v637 = vunpack.c.l.b16 %v535
    %v638 = vunpack.c.h.b16 %v535
    %v639 = vunpack.c.l.b16 %v536
    %v640 = vunpack.c.h.b16 %v536
    %v641 = vpack.c.b16 %v579, %v577
    %v642 = vpack.c.b16 %v580, %v578
    %v643 = vpack.c.b16 %v583, %v581
    %v644 = vpack.c.b16 %v584, %v582
    %v645 = vpack.c.b16 %v587, %v585
    %v646 = vpack.c.b16 %v588, %v586
    %v647 = vpack.c.b16 %v591, %v589
    %v648 = vpack.c.b16 %v592, %v590
    %v649 = vpack.c.b16 %v595, %v593
    %v650 = vpack.c.b16 %v596, %v594
    %v651 = vpack.c.b16 %v599, %v597
    %v652 = vpack.c.b16 %v600, %v598
    %v653 = vpack.c.b16 %v603, %v601
    %v654 = vpack.c.b16 %v604, %v602
    %v655 = vpack.c.b16 %v607, %v605
    %v656 = vpack.c.b16 %v608, %v606
    %v657 = vpack.c.b16 %v611, %v609
    %v658 = vpack.c.b16 %v612, %v610
    %v659 = vpack.c.b16 %v615, %v613
    %v660 = vpack.c.b16 %v616, %v614
    %v661 = vpack.c.b16 %v619, %v617
    %v662 = vpack.c.b16 %v620, %v618
    %v663 = vpack.c.b16 %v623, %v621
    %v664 = vpack.c.b16 %v624, %v622
    %v665 = vpack.c.b16 %v627, %v625
    %v666 = vpack.c.b16 %v628, %v626
    %v667 = vpack.c.b16 %v631, %v629
    %v668 = vpack.c.b16 %v632, %v630
    %v669 = vpack.c.b16 %v635, %v633
    %v670 = vpack.c.b16 %v636, %v634
    %v671 = vpack.c.b16 %v639, %v637
    %v672 = vpack.c.b16 %v640, %v638
    %705 = vmatprep.subr.bf16.mxu0 %v642
    %706 = vmatpush1.bf16.msra.mxu0 %v641
    %707 = vmatprep.subr.bf16.mxu0 %v644
    %708 = vmatpush1.bf16.msra.mxu0 %v643
    %709 = vmatprep.subr.bf16.mxu0 %v646
    %710 = vmatpush1.bf16.msra.mxu0 %v645
    %711 = vmatprep.subr.bf16.mxu0 %v648
    %712 = vmatpush1.bf16.msra.mxu0 %v647
    %713 = vmatprep.subr.bf16.mxu0 %v650
    %714 = vmatpush1.bf16.msra.mxu0 %v649
    %715 = vmatprep.subr.bf16.mxu0 %v652
    %716 = vmatpush1.bf16.msra.mxu0 %v651
    %717 = vmatprep.subr.bf16.mxu0 %v654
    %718 = vmatpush1.bf16.msra.mxu0 %v653
    %719 = vmatprep.subr.bf16.mxu0 %v656
    %720 = vmatpush1.bf16.msra.mxu0 %v655
    %721 = vmatprep.subr.bf16.mxu0 %v658
    %722 = vmatpush1.bf16.msra.mxu0 %v657
    %723 = vmatprep.subr.bf16.mxu0 %v660
    %724 = vmatpush1.bf16.msra.mxu0 %v659
    %725 = vmatprep.subr.bf16.mxu0 %v662
    %726 = vmatpush1.bf16.msra.mxu0 %v661
    %727 = vmatprep.subr.bf16.mxu0 %v664
    %728 = vmatpush1.bf16.msra.mxu0 %v663
    %729 = vmatprep.subr.bf16.mxu0 %v666
    %730 = vmatpush1.bf16.msra.mxu0 %v665
    %731 = vmatprep.subr.bf16.mxu0 %v668
    %732 = vmatpush1.bf16.msra.mxu0 %v667
    %733 = vmatprep.subr.bf16.mxu0 %v670
    %734 = vmatpush1.bf16.msra.mxu0 %v669
    %735 = vmatprep.subr.bf16.mxu0 %v672
    %736 = vmatpush1.bf16.msra.mxu0 %v671
    %737 = vmatprep.mubr.bf16.mxu0 %v504
    %738 = vmatmul.mubr.bf16.gmra.mrb[0].mxu0 %v503
    %v739 = vpop.f32.mrb[0].mxu0
    %v740 = vadd.f32 %v540, %v739
    %v741 = vpop.f32.mrb[0].mxu0
    %v742 = vadd.f32 %v544, %v741
    %v743 = vpop.f32.mrb[0].mxu0
    %v744 = vpop.f32.mrb[0].mxu0
    %745 = vdwg.mxu0
    %v746 = vmax.f32 %v740, 0.0
    %v747 = vmax.f32 %v742, 0.0
    %v748 = vpack.c.bf16 %v746, %v746
    %v749 = vpack.c.bf16 %v747, %v747
    %v750 = vld [vmem:[#allocation10] sm:$0xff]
    %v751 = vld [vmem:[#allocation10 + $0x8] sm:$0xff]
    %v752 = vld [vmem:[#allocation10 + $0x10] sm:$0xff]
    %v753 = vld [vmem:[#allocation10 + $0x18] sm:$0xff]
    %v754 = vld [vmem:[#allocation10 + $0x20] sm:$0xff]
    %v755 = vld [vmem:[#allocation10 + $0x28] sm:$0xff]
    %v756 = vld [vmem:[#allocation10 + $0x30] sm:$0xff]
    %v757 = vld [vmem:[#allocation10 + $0x38] sm:$0xff]
    %v758 = vld [vmem:[#allocation10 + $0x40] sm:$0xff]
    %v759 = vld [vmem:[#allocation10 + $0x48] sm:$0xff]
    %v760 = vld [vmem:[#allocation10 + $0x50] sm:$0xff]
    %v761 = vld [vmem:[#allocation10 + $0x58] sm:$0xff]
    %v762 = vld [vmem:[#allocation10 + $0x60] sm:$0xff]
    %v763 = vld [vmem:[#allocation10 + $0x68] sm:$0xff]
    %v764 = vld [vmem:[#allocation10 + $0x70] sm:$0xff]
    %v765 = vld [vmem:[#allocation10 + $0x78] sm:$0xff]
    %v766 = vld [vmem:[#allocation10 + $0x80] sm:$0xff]
    %v767 = vld [vmem:[#allocation10 + $0x88] sm:$0xff]
    %v768 = vld [vmem:[#allocation10 + $0x90] sm:$0xff]
    %v769 = vld [vmem:[#allocation10 + $0x98] sm:$0xff]
    %v770 = vld [vmem:[#allocation10 + $0xa0] sm:$0xff]
    %v771 = vld [vmem:[#allocation10 + $0xa8] sm:$0xff]
    %v772 = vld [vmem:[#allocation10 + $0xb0] sm:$0xff]
    %v773 = vld [vmem:[#allocation10 + $0xb8] sm:$0xff]
    %v774 = vld [vmem:[#allocation10 + $0xc0] sm:$0xff]
    %v775 = vld [vmem:[#allocation10 + $0xc8] sm:$0xff]
    %v776 = vld [vmem:[#allocation10 + $0xd0] sm:$0xff]
    %v777 = vld [vmem:[#allocation10 + $0xd8] sm:$0xff]
    %v778 = vld [vmem:[#allocation10 + $0xe0] sm:$0xff]
    %v779 = vld [vmem:[#allocation10 + $0xe8] sm:$0xff]
    %v780 = vld [vmem:[#allocation10 + $0xf0] sm:$0xff]
    %v781 = vld [vmem:[#allocation10 + $0xf8] sm:$0xff]
    %v782 = vlaneseq
    %v783 = vshrl.u32 %v782, 7
    %v784 = vsub.s32 3, %v783
    %v785 = vrot.slane %v108, %v784
    %v786 = vlaneseq
    %v787 = vshrl.u32 %v786, 7
    %v788 = vsub.s32 3, %v787
    %v789 = vrot.slane %v109, %v788
    %v822 = vunpack.c.l.b16 %v750
    %v823 = vunpack.c.h.b16 %v750
    %v824 = vunpack.c.l.b16 %v751
    %v825 = vunpack.c.h.b16 %v751
    %v826 = vunpack.c.l.b16 %v752
    %v827 = vunpack.c.h.b16 %v752
    %v828 = vunpack.c.l.b16 %v753
    %v829 = vunpack.c.h.b16 %v753
    %v830 = vunpack.c.l.b16 %v754
    %v831 = vunpack.c.h.b16 %v754
    %v832 = vunpack.c.l.b16 %v755
    %v833 = vunpack.c.h.b16 %v755
    %v834 = vunpack.c.l.b16 %v756
    %v835 = vunpack.c.h.b16 %v756
    %v836 = vunpack.c.l.b16 %v757
    %v837 = vunpack.c.h.b16 %v757
    %v838 = vunpack.c.l.b16 %v758
    %v839 = vunpack.c.h.b16 %v758
    %v840 = vunpack.c.l.b16 %v759
    %v841 = vunpack.c.h.b16 %v759
    %v842 = vunpack.c.l.b16 %v760
    %v843 = vunpack.c.h.b16 %v760
    %v844 = vunpack.c.l.b16 %v761
    %v845 = vunpack.c.h.b16 %v761
    %v846 = vunpack.c.l.b16 %v762
    %v847 = vunpack.c.h.b16 %v762
    %v848 = vunpack.c.l.b16 %v763
    %v849 = vunpack.c.h.b16 %v763
    %v850 = vunpack.c.l.b16 %v764
    %v851 = vunpack.c.h.b16 %v764
    %v852 = vunpack.c.l.b16 %v765
    %v853 = vunpack.c.h.b16 %v765
    %v854 = vunpack.c.l.b16 %v766
    %v855 = vunpack.c.h.b16 %v766
    %v856 = vunpack.c.l.b16 %v767
    %v857 = vunpack.c.h.b16 %v767
    %v858 = vunpack.c.l.b16 %v768
    %v859 = vunpack.c.h.b16 %v768
    %v860 = vunpack.c.l.b16 %v769
    %v861 = vunpack.c.h.b16 %v769
    %v862 = vunpack.c.l.b16 %v770
    %v863 = vunpack.c.h.b16 %v770
    %v864 = vunpack.c.l.b16 %v771
    %v865 = vunpack.c.h.b16 %v771
    %v866 = vunpack.c.l.b16 %v772
    %v867 = vunpack.c.h.b16 %v772
    %v868 = vunpack.c.l.b16 %v773
    %v869 = vunpack.c.h.b16 %v773
    %v870 = vunpack.c.l.b16 %v774
    %v871 = vunpack.c.h.b16 %v774
    %v872 = vunpack.c.l.b16 %v775
    %v873 = vunpack.c.h.b16 %v775
    %v874 = vunpack.c.l.b16 %v776
    %v875 = vunpack.c.h.b16 %v776
    %v876 = vunpack.c.l.b16 %v777
    %v877 = vunpack.c.h.b16 %v777
    %v878 = vunpack.c.l.b16 %v778
    %v879 = vunpack.c.h.b16 %v778
    %v880 = vunpack.c.l.b16 %v779
    %v881 = vunpack.c.h.b16 %v779
    %v882 = vunpack.c.l.b16 %v780
    %v883 = vunpack.c.h.b16 %v780
    %v884 = vunpack.c.l.b16 %v781
    %v885 = vunpack.c.h.b16 %v781
    %v886 = vpack.c.b16 %v824, %v822
    %v887 = vpack.c.b16 %v825, %v823
    %v888 = vpack.c.b16 %v828, %v826
    %v889 = vpack.c.b16 %v829, %v827
    %v890 = vpack.c.b16 %v832, %v830
    %v891 = vpack.c.b16 %v833, %v831
    %v892 = vpack.c.b16 %v836, %v834
    %v893 = vpack.c.b16 %v837, %v835
    %v894 = vpack.c.b16 %v840, %v838
    %v895 = vpack.c.b16 %v841, %v839
    %v896 = vpack.c.b16 %v844, %v842
    %v897 = vpack.c.b16 %v845, %v843
    %v898 = vpack.c.b16 %v848, %v846
    %v899 = vpack.c.b16 %v849, %v847
    %v900 = vpack.c.b16 %v852, %v850
    %v901 = vpack.c.b16 %v853, %v851
    %v902 = vpack.c.b16 %v856, %v854
    %v903 = vpack.c.b16 %v857, %v855
    %v904 = vpack.c.b16 %v860, %v858
    %v905 = vpack.c.b16 %v861, %v859
    %v906 = vpack.c.b16 %v864, %v862
    %v907 = vpack.c.b16 %v865, %v863
    %v908 = vpack.c.b16 %v868, %v866
    %v909 = vpack.c.b16 %v869, %v867
    %v910 = vpack.c.b16 %v872, %v870
    %v911 = vpack.c.b16 %v873, %v871
    %v912 = vpack.c.b16 %v876, %v874
    %v913 = vpack.c.b16 %v877, %v875
    %v914 = vpack.c.b16 %v880, %v878
    %v915 = vpack.c.b16 %v881, %v879
    %v916 = vpack.c.b16 %v884, %v882
    %v917 = vpack.c.b16 %v885, %v883
    %950 = vmatprep.subr.bf16.mxu0 %v887
    %951 = vmatpush1.bf16.msra.mxu0 %v886
    %952 = vmatprep.subr.bf16.mxu0 %v889
    %953 = vmatpush1.bf16.msra.mxu0 %v888
    %954 = vmatprep.subr.bf16.mxu0 %v891
    %955 = vmatpush1.bf16.msra.mxu0 %v890
    %956 = vmatprep.subr.bf16.mxu0 %v893
    %957 = vmatpush1.bf16.msra.mxu0 %v892
    %958 = vmatprep.subr.bf16.mxu0 %v895
    %959 = vmatpush1.bf16.msra.mxu0 %v894
    %960 = vmatprep.subr.bf16.mxu0 %v897
    %961 = vmatpush1.bf16.msra.mxu0 %v896
    %962 = vmatprep.subr.bf16.mxu0 %v899
    %963 = vmatpush1.bf16.msra.mxu0 %v898
    %964 = vmatprep.subr.bf16.mxu0 %v901
    %965 = vmatpush1.bf16.msra.mxu0 %v900
    %966 = vmatprep.subr.bf16.mxu0 %v903
    %967 = vmatpush1.bf16.msra.mxu0 %v902
    %968 = vmatprep.subr.bf16.mxu0 %v905
    %969 = vmatpush1.bf16.msra.mxu0 %v904
    %970 = vmatprep.subr.bf16.mxu0 %v907
    %971 = vmatpush1.bf16.msra.mxu0 %v906
    %972 = vmatprep.subr.bf16.mxu0 %v909
    %973 = vmatpush1.bf16.msra.mxu0 %v908
    %974 = vmatprep.subr.bf16.mxu0 %v911
    %975 = vmatpush1.bf16.msra.mxu0 %v910
    %976 = vmatprep.subr.bf16.mxu0 %v913
    %977 = vmatpush1.bf16.msra.mxu0 %v912
    %978 = vmatprep.subr.bf16.mxu0 %v915
    %979 = vmatpush1.bf16.msra.mxu0 %v914
    %980 = vmatprep.subr.bf16.mxu0 %v917
    %981 = vmatpush1.bf16.msra.mxu0 %v916
    %982 = vmatprep.mubr.bf16.mxu0 %v749
    %983 = vmatmul.mubr.bf16.gmra.mrb[0].mxu0 %v748
    %v984 = vpop.f32.mrb[0].mxu0
    %v985 = vadd.f32 %v785, %v984
    %v986 = vpop.f32.mrb[0].mxu0
    %v987 = vadd.f32 %v789, %v986
    %v988 = vpop.f32.mrb[0].mxu0
    %v989 = vpop.f32.mrb[0].mxu0
    %990 = vdwg.mxu0
    %v991 = vmax.f32 %v985, 0.0
    %v992 = vmax.f32 %v987, 0.0
    %v993 = vpack.c.bf16 %v991, %v991
    %v994 = vpack.c.bf16 %v992, %v992
    %v995 = vld [vmem:[#allocation11] sm:$0xf]
    %v996 = vld [vmem:[#allocation11 + $0x4] sm:$0xf]
    %v997 = vld [vmem:[#allocation11 + $0x8] sm:$0xf]
    %v998 = vld [vmem:[#allocation11 + $0xc] sm:$0xf]
    %v999 = vld [vmem:[#allocation11 + $0x10] sm:$0xf]
    %v1000 = vld [vmem:[#allocation11 + $0x14] sm:$0xf]
    %v1001 = vld [vmem:[#allocation11 + $0x18] sm:$0xf]
    %v1002 = vld [vmem:[#allocation11 + $0x1c] sm:$0xf]
    %v1003 = vld [vmem:[#allocation11 + $0x20] sm:$0xf]
    %v1004 = vld [vmem:[#allocation11 + $0x24] sm:$0xf]
    %v1005 = vld [vmem:[#allocation11 + $0x28] sm:$0xf]
    %v1006 = vld [vmem:[#allocation11 + $0x2c] sm:$0xf]
    %v1007 = vld [vmem:[#allocation11 + $0x30] sm:$0xf]
    %v1008 = vld [vmem:[#allocation11 + $0x34] sm:$0xf]
    %v1009 = vld [vmem:[#allocation11 + $0x38] sm:$0xf]
    %v1010 = vld [vmem:[#allocation11 + $0x3c] sm:$0xf]
    %v1011 = vld [vmem:[#allocation11 + $0x40] sm:$0xf]
    %v1012 = vld [vmem:[#allocation11 + $0x44] sm:$0xf]
    %v1013 = vld [vmem:[#allocation11 + $0x48] sm:$0xf]
    %v1014 = vld [vmem:[#allocation11 + $0x4c] sm:$0xf]
    %v1015 = vld [vmem:[#allocation11 + $0x50] sm:$0xf]
    %v1016 = vld [vmem:[#allocation11 + $0x54] sm:$0xf]
    %v1017 = vld [vmem:[#allocation11 + $0x58] sm:$0xf]
    %v1018 = vld [vmem:[#allocation11 + $0x5c] sm:$0xf]
    %v1019 = vld [vmem:[#allocation11 + $0x60] sm:$0xf]
    %v1020 = vld [vmem:[#allocation11 + $0x64] sm:$0xf]
    %v1021 = vld [vmem:[#allocation11 + $0x68] sm:$0xf]
    %v1022 = vld [vmem:[#allocation11 + $0x6c] sm:$0xf]
    %v1023 = vld [vmem:[#allocation11 + $0x70] sm:$0xf]
    %v1024 = vld [vmem:[#allocation11 + $0x74] sm:$0xf]
    %v1025 = vld [vmem:[#allocation11 + $0x78] sm:$0xf]
    %v1026 = vld [vmem:[#allocation11 + $0x7c] sm:$0xf]
    %v1027 = vlaneseq
    %v1028 = vshrl.u32 %v1027, 7
    %v1029 = vsub.s32 4, %v1028
    %v1030 = vrot.slane %v108, %v1029
    %v1063 = vunpack.c.l.b16 %v995
    %v1064 = vunpack.c.l.b16 %v996
    %v1065 = vunpack.c.l.b16 %v997
    %v1066 = vunpack.c.l.b16 %v998
    %v1067 = vunpack.c.l.b16 %v999
    %v1068 = vunpack.c.l.b16 %v1000
    %v1069 = vunpack.c.l.b16 %v1001
    %v1070 = vunpack.c.l.b16 %v1002
    %v1071 = vunpack.c.l.b16 %v1003
    %v1072 = vunpack.c.l.b16 %v1004
    %v1073 = vunpack.c.l.b16 %v1005
    %v1074 = vunpack.c.l.b16 %v1006
    %v1075 = vunpack.c.l.b16 %v1007
    %v1076 = vunpack.c.l.b16 %v1008
    %v1077 = vunpack.c.l.b16 %v1009
    %v1078 = vunpack.c.l.b16 %v1010
    %v1079 = vunpack.c.l.b16 %v1011
    %v1080 = vunpack.c.l.b16 %v1012
    %v1081 = vunpack.c.l.b16 %v1013
    %v1082 = vunpack.c.l.b16 %v1014
    %v1083 = vunpack.c.l.b16 %v1015
    %v1084 = vunpack.c.l.b16 %v1016
    %v1085 = vunpack.c.l.b16 %v1017
    %v1086 = vunpack.c.l.b16 %v1018
    %v1087 = vunpack.c.l.b16 %v1019
    %v1088 = vunpack.c.l.b16 %v1020
    %v1089 = vunpack.c.l.b16 %v1021
    %v1090 = vunpack.c.l.b16 %v1022
    %v1091 = vunpack.c.l.b16 %v1023
    %v1092 = vunpack.c.l.b16 %v1024
    %v1093 = vunpack.c.l.b16 %v1025
    %v1094 = vunpack.c.l.b16 %v1026
    %v1095 = vpack.c.b16 %v1064, %v1063
    %v1096 = vpack.c.b16 %v1066, %v1065
    %v1097 = vpack.c.b16 %v1068, %v1067
    %v1098 = vpack.c.b16 %v1070, %v1069
    %v1099 = vpack.c.b16 %v1072, %v1071
    %v1100 = vpack.c.b16 %v1074, %v1073
    %v1101 = vpack.c.b16 %v1076, %v1075
    %v1102 = vpack.c.b16 %v1078, %v1077
    %v1103 = vpack.c.b16 %v1080, %v1079
    %v1104 = vpack.c.b16 %v1082, %v1081
    %v1105 = vpack.c.b16 %v1084, %v1083
    %v1106 = vpack.c.b16 %v1086, %v1085
    %v1107 = vpack.c.b16 %v1088, %v1087
    %v1108 = vpack.c.b16 %v1090, %v1089
    %v1109 = vpack.c.b16 %v1092, %v1091
    %v1110 = vpack.c.b16 %v1094, %v1093
    %1127 = vmatprep.subr.bf16.mxu0 0
    %1128 = vmatpush1.bf16.msra.mxu0 %v1095
    %1129 = vmatprep.subr.bf16.mxu0 0
    %1130 = vmatpush1.bf16.msra.mxu0 %v1096
    %1131 = vmatprep.subr.bf16.mxu0 0
    %1132 = vmatpush1.bf16.msra.mxu0 %v1097
    %1133 = vmatprep.subr.bf16.mxu0 0
    %1134 = vmatpush1.bf16.msra.mxu0 %v1098
    %1135 = vmatprep.subr.bf16.mxu0 0
    %1136 = vmatpush1.bf16.msra.mxu0 %v1099
    %1137 = vmatprep.subr.bf16.mxu0 0
    %1138 = vmatpush1.bf16.msra.mxu0 %v1100
    %1139 = vmatprep.subr.bf16.mxu0 0
    %1140 = vmatpush1.bf16.msra.mxu0 %v1101
    %1141 = vmatprep.subr.bf16.mxu0 0
    %1142 = vmatpush1.bf16.msra.mxu0 %v1102
    %1143 = vmatprep.subr.bf16.mxu0 0
    %1144 = vmatpush1.bf16.msra.mxu0 %v1103
    %1145 = vmatprep.subr.bf16.mxu0 0
    %1146 = vmatpush1.bf16.msra.mxu0 %v1104
    %1147 = vmatprep.subr.bf16.mxu0 0
    %1148 = vmatpush1.bf16.msra.mxu0 %v1105
    %1149 = vmatprep.subr.bf16.mxu0 0
    %1150 = vmatpush1.bf16.msra.mxu0 %v1106
    %1151 = vmatprep.subr.bf16.mxu0 0
    %1152 = vmatpush1.bf16.msra.mxu0 %v1107
    %1153 = vmatprep.subr.bf16.mxu0 0
    %1154 = vmatpush1.bf16.msra.mxu0 %v1108
    %1155 = vmatprep.subr.bf16.mxu0 0
    %1156 = vmatpush1.bf16.msra.mxu0 %v1109
    %1157 = vmatprep.subr.bf16.mxu0 0
    %1158 = vmatpush1.bf16.msra.mxu0 %v1110
    %1159 = vmatprep.mubr.bf16.mxu0 %v994
    %1160 = vmatmul.mubr.bf16.gmra.mrb[0].mxu0 %v993
    %v1161 = vpop.f32.mrb[0].mxu0
    %v1162 = vadd.f32 %v1030, %v1161
    %v1163 = vpop.f32.mrb[0].mxu0
    %v1164 = vpop.f32.mrb[0].mxu0
    %v1165 = vpop.f32.mrb[0].mxu0
    %1166 = vdwg.mxu0
    %v1167 = vmax.f32 %v1162, 0.0
    %1168 = vst [vmem:[#allocation13] sm:$0xff] %v1167
    // Predicated region
    $region54: #{tpu_custom_call.1} parent=1 // pred_check
      _
    $region55: #{tpu_custom_call.1} parent=1 // pred_check_branch
      %1170 = sbr.rel (0) target = $region57
    $region56: #{tpu_custom_call.1} parent=1 // pred_region
      %s1172 = ssub.s32 128, 128
      %1173 = vsyncadd [#allocation4], %s1172
      %s1175 = sshll.u32 [#allocation13], 4
      %s1176 = int_to_ptr.vmem [resolvable:$true] %s1175
      %1178 = dma.vmem_to_hbm [thread:$0]  %s1176, 128, %s7, [#allocation4]
    $region57: #{tpu_custom_call.1} parent=1 // pred_fallthru
      _
    // Predicated region
    $region58: #{tpu_custom_call.1} parent=1 // pred_check
      _
    $region59: #{tpu_custom_call.1} parent=1 // pred_check_branch
      %1180 = sbr.rel (0) target = $region61
    $region60: #{tpu_custom_call.1} parent=1 // pred_region
      %1181 = dma.done [#allocation4], 128
    $region61: #{tpu_custom_call.1} parent=1 // pred_fallthru
      _
    %1182 = vsyncpa [#allocation3], 1
    %1183 = vsyncpa [#allocation6], 1
    %1184 = vsyncpa [#allocation9], 1
    %1185 = vsyncpa [#allocation12], 1
    %1186 = vsyncpa [#allocation4], 1

</llo_original>
